<compile_context>
chip_gen: v7x
topology: tpu7x:2x2x1
jax: 0.10.0
libtpu: 0.0.40
codegen_flags: <defaults>
</compile_context>

<pallas_src>
import functools

import jax
import jax.numpy as jnp
from jax.experimental import pallas as pl
from jax.experimental.pallas import tpu as pltpu

WIDTH = 1024   # fixed hidden width from the module's __init__
LANE = 128
SUBLANE = 8


def _round_up(x, m):
    return ((x + m - 1) // m) * m


def head_kernel(x_ref, w1_ref, b1_ref, w2_ref, b2_ref, o_ref, acc_ref):
    """One (batch-tile i, hidden-chunk j) grid step:
         acc += relu(x @ W1[:, chunk] + b1[chunk]) @ W2[chunk, :]
       finalized with + b2 on the last hidden chunk."""
    j = pl.program_id(1)

    @pl.when(j == 0)
    def _init():
        acc_ref[...] = jnp.zeros_like(acc_ref)

    # First linear (hidden chunk) + bias + ReLU, accumulation in f32 on the MXU.
    x = x_ref[...].astype(w1_ref.dtype)
    h = jnp.dot(x, w1_ref[...], preferred_element_type=jnp.float32)
    h = jnp.maximum(h + b1_ref[...].astype(jnp.float32), 0.0)
    # Dropout(0.5): identity in eval mode.
    # Second linear (partial contraction over this hidden chunk).
    acc_ref[...] += jnp.dot(h.astype(w2_ref.dtype), w2_ref[...],
                            preferred_element_type=jnp.float32)

    @pl.when(j == pl.num_programs(1) - 1)
    def _finalize():
        o_ref[...] = (acc_ref[...] + b2_ref[...].astype(jnp.float32)).astype(o_ref.dtype)


@functools.partial(jax.jit, static_argnames=("tb", "tc"))
def head_forward(x, w1, b1, w2, b2, *, tb=128, tc=256):
    B, F = x.shape
    Fw, W = w1.shape
    C = w2.shape[1]
    assert Fw == F and w2.shape[0] == W and b1.shape == (1, W) and b2.shape == (1, C)

    # Batch tile: fill MXU rows, but collapse to a single grid step for tiny batches.
    tb = min(tb, _round_up(B, SUBLANE))
    tb = max(SUBLANE, _round_up(tb, SUBLANE))
    Bp = _round_up(B, tb)

    # Hidden-dim chunk: lane-dense multiple of 128 that divides WIDTH.
    tc = min(tc, W)
    if W % tc != 0 or tc % LANE != 0:
        tc = W

    # Lane-dense output: pad class dim to a multiple of 128 (unmasked vst, full MXU columns).
    Cp = _round_up(C, LANE)

    xp = jnp.pad(x, ((0, Bp - B), (0, 0)))
    w2p = jnp.pad(w2, ((0, 0), (0, Cp - C)))
    b2p = jnp.pad(b2, ((0, 0), (0, Cp - C)))

    nb, nh = Bp // tb, W // tc

    xi, wi1, bi1, wi2, bi2 = (a.dtype.itemsize for a in (x, w1, b1, w2, b2))
    # Double-buffered tiles + f32 accumulator; give the compiler headroom but stay
    # within the v7x scoped-VMEM budget.
    vmem_bytes = 2 * (tb * F * xi + F * tc * wi1 + tc * bi1
                      + tc * Cp * wi2 + Cp * bi2 + tb * Cp * xi) + tb * Cp * 4
    vmem_limit = int(min(max(4 * vmem_bytes, 8 << 20), 48 << 20))

    flops = 2 * Bp * (F * W + W * Cp)
    bytes_accessed = (Bp * F * xi + F * W * wi1 + W * bi1
                      + W * Cp * wi2 + Cp * bi2 + Bp * Cp * xi)

    out = pl.pallas_call(
        head_kernel,
        out_shape=jax.ShapeDtypeStruct((Bp, Cp), x.dtype),
        grid_spec=pltpu.PrefetchScalarGridSpec(
            num_scalar_prefetch=0,
            grid=(nb, nh),                                       # (batch tiles, hidden chunks)
            in_specs=[
                pl.BlockSpec((tb, F), lambda i, j: (i, 0)),      # x batch tile (constant over j)
                pl.BlockSpec((F, tc), lambda i, j: (0, j)),      # W1 hidden chunk
                pl.BlockSpec((1, tc), lambda i, j: (0, j)),      # b1 hidden chunk
                pl.BlockSpec((tc, Cp), lambda i, j: (j, 0)),     # W2 hidden chunk (lane-dense cols)
                pl.BlockSpec((1, Cp), lambda i, j: (0, 0)),      # b2 (resident)
            ],
            out_specs=pl.BlockSpec((tb, Cp), lambda i, j: (i, 0)),
            scratch_shapes=[pltpu.VMEM((tb, Cp), jnp.float32)],  # f32 accumulator
        ),
        compiler_params=pltpu.CompilerParams(
            dimension_semantics=("parallel", "arbitrary"),
            vmem_limit_bytes=vmem_limit,
        ),
        cost_estimate=pl.CostEstimate(
            flops=int(flops), transcendentals=0, bytes_accessed=int(bytes_accessed)),
    )(xp, w1, b1, w2p, b2p)

    return out[:B, :C]


def init_head_params(key, features_dim, num_classes, dtype=jnp.float32):
    """Deterministic init mimicking PyTorch nn.Linear default (uniform +/- 1/sqrt(fan_in))."""
    k1, k2, k3, k4 = jax.random.split(key, 4)
    bound1 = 1.0 / jnp.sqrt(features_dim)
    bound2 = 1.0 / jnp.sqrt(WIDTH)
    w1 = jax.random.uniform(k1, (features_dim, WIDTH), dtype, -bound1, bound1)
    b1 = jax.random.uniform(k2, (1, WIDTH), dtype, -bound1, bound1)
    w2 = jax.random.uniform(k3, (WIDTH, num_classes), dtype, -bound2, bound2)
    b2 = jax.random.uniform(k4, (1, num_classes), dtype, -bound2, bound2)
    return w1, b1, w2, b2


if __name__ == "__main__":
    features_dim = 32
    num_classes = 16
    batch = 8

    key = jax.random.PRNGKey(0)
    kx, kp = jax.random.split(key)
    x = jax.random.normal(kx, (batch, features_dim), jnp.float32)
    w1, b1, w2, b2 = init_head_params(kp, features_dim, num_classes)

    # f32 weight path.
    out = jax.block_until_ready(head_forward(x, w1, b1, w2, b2))

    # Pure-JAX reference (eval-mode dropout == identity).
    h_ref = jnp.maximum(x @ w1 + b1, 0.0)
    ref = h_ref @ w2 + b2
    assert out.shape == (batch, num_classes)
    assert jnp.allclose(out, ref, atol=1e-5, rtol=1e-5), "f32 mismatch vs reference"

    # bf16 weight path (v6e/v7x MXU fast path), f32 accumulation; loose tolerance vs f32 ref.
    w1b, b1b, w2b, b2b = (p.astype(jnp.bfloat16) for p in (w1, b1, w2, b2))
    out_bf16 = jax.block_until_ready(head_forward(x, w1b, b1b, w2b, b2b))
    tol = 0.05 * float(jnp.max(jnp.abs(ref))) + 1e-3
    assert out_bf16.shape == (batch, num_classes)
    assert jnp.allclose(out_bf16, ref, atol=tol, rtol=0.05), "bf16 mismatch vs reference"

    print("KERNEL_OK")
</pallas_src>

<mosaic_0001>
module attributes {stable_mosaic.version = 11 : i64} {
  func.func @head_kernel(%arg0: i32, %arg1: i32, %arg2: memref<8x32xf32, #tpu.memory_space<vmem>>, %arg3: memref<32x256xf32, #tpu.memory_space<vmem>>, %arg4: memref<1x256xf32, #tpu.memory_space<vmem>>, %arg5: memref<256x128xf32, #tpu.memory_space<vmem>>, %arg6: memref<1x128xf32, #tpu.memory_space<vmem>>, %arg7: memref<8x128xf32, #tpu.memory_space<vmem>>, %arg8: memref<8x128xf32, #tpu.memory_space<vmem>>) attributes {dimension_semantics = [#tpu.dimension_semantics<parallel>, #tpu.dimension_semantics<arbitrary>], iteration_bounds = array<i64: 1, 4>, scalar_prefetch = 0 : i64, scratch_operands = 1 : i64, tpu.core_type = #tpu.core_type<tc>, window_params = [{transform_indices = @transform_0, window_bounds = array<i64: 8, 32>}, {transform_indices = @transform_1, window_bounds = array<i64: 32, 256>}, {transform_indices = @transform_2, window_bounds = array<i64: 1, 256>}, {transform_indices = @transform_3, window_bounds = array<i64: 256, 128>}, {pipeline_mode = #tpu.pipeline_mode<synchronous>, transform_indices = @transform_4, window_bounds = array<i64: 1, 128>}, {transform_indices = @transform_5, window_bounds = array<i64: 8, 128>}]} {
    %c0_i32 = arith.constant 0 : i32
    %0 = arith.cmpi eq, %arg1, %c0_i32 : i32
    %1 = arith.extui %0 : i1 to i32
    %c0_i32_0 = arith.constant 0 : i32
    %2 = arith.cmpi ne, %1, %c0_i32_0 : i32
    scf.if %2 {
      %cst_15 = arith.constant 0.000000e+00 : f32
      %19 = vector.broadcast %cst_15 : f32 to vector<8x128xf32>
      %c0_16 = arith.constant 0 : index
      %c0_17 = arith.constant 0 : index
      %20 = vector.load %arg8[%c0_16, %c0_17] : memref<8x128xf32, #tpu.memory_space<vmem>>, vector<8x128xf32>
      tpu.vector_store %arg8[%c0_16, %c0_17], %19 {strides = array<i32>} : memref<8x128xf32, #tpu.memory_space<vmem>>, vector<8x128xf32>,
    } else {
    }
    %c0 = arith.constant 0 : index
    %c0_1 = arith.constant 0 : index
    %3 = vector.load %arg2[%c0, %c0_1] : memref<8x32xf32, #tpu.memory_space<vmem>>, vector<8x32xf32>
    %c0_2 = arith.constant 0 : index
    %c0_3 = arith.constant 0 : index
    %4 = vector.load %arg3[%c0_2, %c0_3] : memref<32x256xf32, #tpu.memory_space<vmem>>, vector<32x256xf32>
    %cst = arith.constant dense<0.000000e+00> : vector<8x256xf32>
    %5 = tpu.matmul %3, %4, %cst {dimension_numbers = #tpu.dot_dimension_numbers<[1], [0], [0], [1], [0, 0, 1, 1], [], []>} : vector<8x32xf32>, vector<32x256xf32>, vector<8x256xf32> -> vector<8x256xf32>
    %c0_4 = arith.constant 0 : index
    %c0_5 = arith.constant 0 : index
    %6 = vector.load %arg4[%c0_4, %c0_5] : memref<1x256xf32, #tpu.memory_space<vmem>>, vector<1x256xf32>
    %7 = vector.broadcast %6 : vector<1x256xf32> to vector<8x256xf32>
    %8 = arith.addf %5, %7 : vector<8x256xf32>
    %cst_6 = arith.constant 0.000000e+00 : f32
    %9 = vector.broadcast %cst_6 : f32 to vector<8x256xf32>
    %10 = arith.maximumf %8, %9 : vector<8x256xf32>
    %c0_7 = arith.constant 0 : index
    %c0_8 = arith.constant 0 : index
    %11 = vector.load %arg8[%c0_7, %c0_8] : memref<8x128xf32, #tpu.memory_space<vmem>>, vector<8x128xf32>
    %c0_9 = arith.constant 0 : index
    %c0_10 = arith.constant 0 : index
    %12 = vector.load %arg5[%c0_9, %c0_10] : memref<256x128xf32, #tpu.memory_space<vmem>>, vector<256x128xf32>
    %cst_11 = arith.constant dense<0.000000e+00> : vector<8x128xf32>
    %13 = tpu.matmul %10, %12, %cst_11 {dimension_numbers = #tpu.dot_dimension_numbers<[1], [0], [0], [1], [0, 0, 1, 1], [], []>} : vector<8x256xf32>, vector<256x128xf32>, vector<8x128xf32> -> vector<8x128xf32>
    %14 = arith.addf %11, %13 : vector<8x128xf32>
    %c0_12 = arith.constant 0 : index
    %c0_13 = arith.constant 0 : index
    %15 = vector.load %arg8[%c0_12, %c0_13] : memref<8x128xf32, #tpu.memory_space<vmem>>, vector<8x128xf32>
    tpu.vector_store %arg8[%c0_12, %c0_13], %14 {strides = array<i32>} : memref<8x128xf32, #tpu.memory_space<vmem>>, vector<8x128xf32>,
    %c3_i32 = arith.constant 3 : i32
    %16 = arith.cmpi eq, %arg1, %c3_i32 : i32
    %17 = arith.extui %16 : i1 to i32
    %c0_i32_14 = arith.constant 0 : i32
    %18 = arith.cmpi ne, %17, %c0_i32_14 : i32
    scf.if %18 {
      %c0_15 = arith.constant 0 : index
      %c0_16 = arith.constant 0 : index
      %19 = vector.load %arg8[%c0_15, %c0_16] : memref<8x128xf32, #tpu.memory_space<vmem>>, vector<8x128xf32>
      %c0_17 = arith.constant 0 : index
      %c0_18 = arith.constant 0 : index
      %20 = vector.load %arg6[%c0_17, %c0_18] : memref<1x128xf32, #tpu.memory_space<vmem>>, vector<1x128xf32>
      %21 = vector.broadcast %20 : vector<1x128xf32> to vector<8x128xf32>
      %22 = arith.addf %19, %21 : vector<8x128xf32>
      %c0_19 = arith.constant 0 : index
      %c0_20 = arith.constant 0 : index
      %23 = vector.load %arg7[%c0_19, %c0_20] : memref<8x128xf32, #tpu.memory_space<vmem>>, vector<8x128xf32>
      tpu.vector_store %arg7[%c0_19, %c0_20], %22 {strides = array<i32>} : memref<8x128xf32, #tpu.memory_space<vmem>>, vector<8x128xf32>,
    } else {
    }
    return
  }
  func.func @transform_0(%arg0: i32, %arg1: i32) -> (i32, i32) {
    %c0_i32 = arith.constant 0 : i32
    %c0_i32_0 = arith.constant 0 : i32
    return %arg0, %c0_i32 : i32, i32
  }
  func.func @transform_1(%arg0: i32, %arg1: i32) -> (i32, i32) {
    %c0_i32 = arith.constant 0 : i32
    %c0_i32_0 = arith.constant 0 : i32
    return %c0_i32, %arg1 : i32, i32
  }
  func.func @transform_2(%arg0: i32, %arg1: i32) -> (i32, i32) {
    %c0_i32 = arith.constant 0 : i32
    %c0_i32_0 = arith.constant 0 : i32
    return %c0_i32, %arg1 : i32, i32
  }
  func.func @transform_3(%arg0: i32, %arg1: i32) -> (i32, i32) {
    %c0_i32 = arith.constant 0 : i32
    %c0_i32_0 = arith.constant 0 : i32
    return %arg1, %c0_i32 : i32, i32
  }
  func.func @transform_4(%arg0: i32, %arg1: i32) -> (i32, i32) {
    %c0_i32 = arith.constant 0 : i32
    %c0_i32_0 = arith.constant 0 : i32
    %c0_i32_1 = arith.constant 0 : i32
    return %c0_i32, %c0_i32_0 : i32, i32
  }
  func.func @transform_5(%arg0: i32, %arg1: i32) -> (i32, i32) {
    %c0_i32 = arith.constant 0 : i32
    %c0_i32_0 = arith.constant 0 : i32
    return %arg0, %c0_i32 : i32, i32
  }
}

</mosaic_0001>

<llo_original>
// kernel: head_forward.1
$region0: #{head_forward.1}
  #allocation0 [shape = 'u32[]', space=smem, size = 0x4, offset = 0x4, fixed_abs, tag = 'smem constant byte address 0x4 - core index']
  #allocation1 [shape = 'u32[144,128]{1,0:T(1,128)}', space=vmem, size = 0x12000, scoped, tag = 'internal scratch']
  #allocation2 [shape = 'f32[8,128]{1,0:T(8,128)}', space=vmem, size = 0x1000, scoped, tag = 'scratch operand']
  %s0 = inlined_call_operand.vmem [shape: f32[8,32], index: 0, kind: input, shape index: {}]
  %s1 = inlined_call_operand.vmem [shape: f32[32,1024], index: 1, kind: input, shape index: {}]
  %s2 = inlined_call_operand.vmem [shape: f32[1,1024], index: 2, kind: input, shape index: {}]
  %s3 = inlined_call_operand.vmem [shape: f32[1024,128], index: 3, kind: input, shape index: {}]
  %s4 = inlined_call_operand.vmem [shape: f32[1,128], index: 4, kind: input, shape index: {}]
  %s5 = inlined_call_operand.hbm [shape: f32[8,128], index: 5, kind: output, shape index: {}]
  %s6 = sld [smem:[#allocation0]]
  $region84: #{head_forward.1} parent=0
    _
  %s8 = ssub.s32 1, %s6
  %s9 = scalar_select 0, %s8, %s6
  $region1: #{head_forward.1} parent=0
    #allocation3 [shape = 'u8[65536]{0}', space=vmem, size = 0x10000, scoped, tag = 'input window, operand 1']
    #allocation4 [shape = 'u8[4096]{0}', space=vmem, size = 0x1000, scoped, tag = 'output window, operand 0, single buffered']
    #allocation5 [shape = 's32[2]{0}', space=sflag, size = 0x8, scoped, tag = 'scoped memory for head_forward.1']
    %10 = vsyncpa [#allocation5], 0
    loop: start=0, step=1, limit=6
    $region2: #{head_forward.1} parent=1 // loop_pre_header
      _
    $region3: #{head_forward.1} parent=1 // loop_header
      %s12 = sphi 0, %s16
      %p13 = scmp.ge.s32.totalorder %s12, 6
      %s19 = sphi 0, %s31
      %s20 = sphi 0, %s27
      %s21 = sphi 0, %s19
      %s22 = sphi 0, %s20
      %s23 = sphi 0, %s21
      %s24 = sphi 0, %s22
      %s34 = sphi 0, %s36
      %s37 = sphi 0, %s34
      %s38 = sphi 0, %s37
      %s54 = sphi 0, %s38
      %s60 = sphi 0, %s62
      %s63 = sphi 0, %s60
      %s64 = sphi 0, %s63
      %s80 = sphi 0, %s64
      %s86 = sphi 0, %s88
      %s89 = sphi 0, %s86
      %s90 = sphi 0, %s89
      %s106 = sphi 0, %s90
      %s112 = sphi 0, %s114
      %s115 = sphi 0, %s112
      %s116 = sphi 0, %s115
      %s132 = sphi 0, %s116
      %s136 = sphi 0, %s136
      %s138 = sphi 0, %s136
      %s139 = sphi 0, %s138
      %s153 = sphi 0, %s139
      %s159 = sphi 0, %s161
      %s162 = sphi 0, %s159
      %s163 = sphi 0, %s162
      %s179 = sphi 0, %s163
    $region4: #{head_forward.1} parent=1 // loop_header_branch
      %15 = sbr.rel (%p13) target = $region8
    $region5: #{head_forward.1} parent=1 // loop_body
      %s17 = ssub.s32 %s12, 1
      %s18 = ssub.s32 %s12, 2
      %s25 = sadd.s32 1, %s20
      %p26 = scmp.ge.s32.totalorder %s25, 4
      %s27 = scalar_select %p26, 0, %s25
      %s28 = sadd.s32 1, %s19
      %s29 = scalar_select %p26, %s28, %s19
      %p30 = scmp.ge.s32.totalorder %s29, 1
      %s31 = scalar_select %p30, 0, %s29
      %s32 = ssub.s32 %s19, %s31
      %p33 = scmp.eq.s32.totalorder %s32, 0
      %s35 = sadd.s32 %s34, 1
      %s36 = scalar_select %p33, %s34, %s35
      %p39 = pneg %p33
      %p40 = scmp.eq.s32.totalorder %s12, 3
      %p41 = por %p39, %p40
      %p42 = scmp.ne.s32.totalorder %s34, %s37
      %p43 = scmp.eq.s32.totalorder %s12, 0
      %p44 = por %p42, %p43
      %p45 = scmp.ne.s32.totalorder %s34, %s37
      %p46 = scmp.eq.s32.totalorder %s17, 3
      %p47 = por %p45, %p46
      %p48 = scmp.ne.s32.totalorder %s37, %s38
      %p49 = scmp.eq.s32.totalorder %s17, 0
      %p50 = por %p48, %p49
      %p51 = scmp.ne.s32.totalorder %s37, %s38
      %p52 = scmp.eq.s32.totalorder %s18, 3
      %p53 = por %p51, %p52
      %p55 = scmp.ne.s32.totalorder %s38, %s54
      %p56 = scmp.eq.s32.totalorder %s18, 0
      %p57 = por %p55, %p56
      %s58 = ssub.s32 %s20, %s27
      %p59 = scmp.eq.s32.totalorder %s58, 0
      %s61 = sadd.s32 %s60, 1
      %s62 = scalar_select %p59, %s60, %s61
      %p65 = pneg %p59
      %p66 = scmp.eq.s32.totalorder %s12, 3
      %p67 = por %p65, %p66
      %p68 = scmp.ne.s32.totalorder %s60, %s63
      %p69 = scmp.eq.s32.totalorder %s12, 0
      %p70 = por %p68, %p69
      %p71 = scmp.ne.s32.totalorder %s60, %s63
      %p72 = scmp.eq.s32.totalorder %s17, 3
      %p73 = por %p71, %p72
      %p74 = scmp.ne.s32.totalorder %s63, %s64
      %p75 = scmp.eq.s32.totalorder %s17, 0
      %p76 = por %p74, %p75
      %p77 = scmp.ne.s32.totalorder %s63, %s64
      %p78 = scmp.eq.s32.totalorder %s18, 3
      %p79 = por %p77, %p78
      %p81 = scmp.ne.s32.totalorder %s64, %s80
      %p82 = scmp.eq.s32.totalorder %s18, 0
      %p83 = por %p81, %p82
      %s84 = ssub.s32 %s20, %s27
      %p85 = scmp.eq.s32.totalorder %s84, 0
      %s87 = sadd.s32 %s86, 1
      %s88 = scalar_select %p85, %s86, %s87
      %p91 = pneg %p85
      %p92 = scmp.eq.s32.totalorder %s12, 3
      %p93 = por %p91, %p92
      %p94 = scmp.ne.s32.totalorder %s86, %s89
      %p95 = scmp.eq.s32.totalorder %s12, 0
      %p96 = por %p94, %p95
      %p97 = scmp.ne.s32.totalorder %s86, %s89
      %p98 = scmp.eq.s32.totalorder %s17, 3
      %p99 = por %p97, %p98
      %p100 = scmp.ne.s32.totalorder %s89, %s90
      %p101 = scmp.eq.s32.totalorder %s17, 0
      %p102 = por %p100, %p101
      %p103 = scmp.ne.s32.totalorder %s89, %s90
      %p104 = scmp.eq.s32.totalorder %s18, 3
      %p105 = por %p103, %p104
      %p107 = scmp.ne.s32.totalorder %s90, %s106
      %p108 = scmp.eq.s32.totalorder %s18, 0
      %p109 = por %p107, %p108
      %s110 = ssub.s32 %s20, %s27
      %p111 = scmp.eq.s32.totalorder %s110, 0
      %s113 = sadd.s32 %s112, 1
      %s114 = scalar_select %p111, %s112, %s113
      %p117 = pneg %p111
      %p118 = scmp.eq.s32.totalorder %s12, 3
      %p119 = por %p117, %p118
      %p120 = scmp.ne.s32.totalorder %s112, %s115
      %p121 = scmp.eq.s32.totalorder %s12, 0
      %p122 = por %p120, %p121
      %p123 = scmp.ne.s32.totalorder %s112, %s115
      %p124 = scmp.eq.s32.totalorder %s17, 3
      %p125 = por %p123, %p124
      %p126 = scmp.ne.s32.totalorder %s115, %s116
      %p127 = scmp.eq.s32.totalorder %s17, 0
      %p128 = por %p126, %p127
      %p129 = scmp.ne.s32.totalorder %s115, %s116
      %p130 = scmp.eq.s32.totalorder %s18, 3
      %p131 = por %p129, %p130
      %p133 = scmp.ne.s32.totalorder %s116, %s132
      %p134 = scmp.eq.s32.totalorder %s18, 0
      %p135 = por %p133, %p134
      %s137 = sadd.s32 %s136, 1
      %p140 = scmp.eq.s32.totalorder %s12, 3
      %p141 = scmp.ne.s32.totalorder %s136, %s138
      %p142 = scmp.eq.s32.totalorder %s12, 0
      %p143 = por %p141, %p142
      %p144 = scmp.ne.s32.totalorder %s136, %s138
      %p145 = scmp.eq.s32.totalorder %s17, 3
      %p146 = por %p144, %p145
      %p147 = scmp.ne.s32.totalorder %s138, %s139
      %p148 = scmp.eq.s32.totalorder %s17, 0
      %p149 = por %p147, %p148
      %p150 = scmp.ne.s32.totalorder %s138, %s139
      %p151 = scmp.eq.s32.totalorder %s18, 3
      %p152 = por %p150, %p151
      %p154 = scmp.ne.s32.totalorder %s139, %s153
      %p155 = scmp.eq.s32.totalorder %s18, 0
      %p156 = por %p154, %p155
      %s157 = ssub.s32 %s19, %s31
      %p158 = scmp.eq.s32.totalorder %s157, 0
      %s160 = sadd.s32 %s159, 1
      %s161 = scalar_select %p158, %s159, %s160
      %p164 = pneg %p158
      %p165 = scmp.eq.s32.totalorder %s12, 3
      %p166 = por %p164, %p165
      %p167 = scmp.ne.s32.totalorder %s159, %s162
      %p168 = scmp.eq.s32.totalorder %s12, 0
      %p169 = por %p167, %p168
      %p170 = scmp.ne.s32.totalorder %s159, %s162
      %p171 = scmp.eq.s32.totalorder %s17, 3
      %p172 = por %p170, %p171
      %p173 = scmp.ne.s32.totalorder %s162, %s163
      %p174 = scmp.eq.s32.totalorder %s17, 0
      %p175 = por %p173, %p174
      %p176 = scmp.ne.s32.totalorder %s162, %s163
      %p177 = scmp.eq.s32.totalorder %s18, 3
      %p178 = por %p176, %p177
      %p180 = scmp.ne.s32.totalorder %s163, %s179
      %p181 = scmp.eq.s32.totalorder %s18, 0
      %p182 = por %p180, %p181
      %p183 = scmp.le.s32.totalorder 1, %s12
      %p184 = scmp.lt.s32.totalorder %s12, 5
      %p185 = pnand %p183, %p184
      %p186 = pneg %p185
      // Predicated region
      $region9: #{head_forward.1} parent=5 // pred_check
        _
      $region10: #{head_forward.1} parent=5 // pred_check_branch
        %188 = sbr.rel (%p185) target = $region12
      $region11: #{head_forward.1} parent=5 // pred_region
        %s189 = ssub.s32 %s12, 1
        // Predicated region
        $region13: #{head_forward.1} parent=11 // pred_check
          %p190 = pneg %p50
        $region14: #{head_forward.1} parent=11 // pred_check_branch
          %192 = sbr.rel (%p190) target = $region16
        $region15: #{head_forward.1} parent=11 // pred_region
          %p193 = scmp.lt.s32.totalorder %s21, 0
          %s194 = scalar_select %p193, %s21, 0
          %s195 = smul.addr %s194, 8
          %s196 = scalar_lea.vmem %s0, %s195
        $region16: #{head_forward.1} parent=11 // pred_fallthru
          _
        // Predicated region
        $region17: #{head_forward.1} parent=11 // pred_check
          %p197 = pneg %p149
        $region18: #{head_forward.1} parent=11 // pred_check_branch
          %199 = sbr.rel (%p197) target = $region20
        $region19: #{head_forward.1} parent=11 // pred_region
          _
        $region20: #{head_forward.1} parent=11 // pred_fallthru
          _
      $region12: #{head_forward.1} parent=5 // pred_fallthru
        _
      %p200 = scmp.lt.s32.totalorder %s12, 4
      // Predicated region
      $region21: #{head_forward.1} parent=5 // pred_check
        %p201 = pneg %p200
      $region22: #{head_forward.1} parent=5 // pred_check_branch
        %203 = sbr.rel (%p201) target = $region24
      $region23: #{head_forward.1} parent=5 // pred_region
        // Predicated region
        $region25: #{head_forward.1} parent=23 // pred_check
          %p204 = pneg %p70
        $region26: #{head_forward.1} parent=23 // pred_check_branch
          %206 = sbr.rel (%p204) target = $region28
        $region27: #{head_forward.1} parent=23 // pred_region
          %s207 = sand.u32 %s60, 1
          %s208 = sand.u32 %s60, 1
          %s209 = smul.addr %s208, 64
          %s210 = scalar_lea.vmem [#allocation3], %s209
          %s211 = smul.u32 2, %s20
          %s212 = smul.addr %s211, 8
          %s213 = scalar_lea.vmem %s1, %s212
          // Predicated region
          $region29: #{head_forward.1} parent=27 // pred_check
            _
          $region30: #{head_forward.1} parent=27 // pred_check_branch
            %215 = sbr.rel (0) target = $region32
          $region31: #{head_forward.1} parent=27 // pred_region
            // Predicated region
            $region33: #{head_forward.1} parent=31 // pred_check
              _
            $region34: #{head_forward.1} parent=31 // pred_check_branch
              %217 = sbr.rel (0) target = $region36
            $region35: #{head_forward.1} parent=31 // pred_region
              loop: start=0, step=1, limit=1
              $region37: #{head_forward.1} parent=35 // loop_pre_header
                _
              $region38: #{head_forward.1} parent=35 // loop_header
                %s219 = sphi 0, %s223
                %p220 = scmp.ge.s32.totalorder %s219, 1
                %s224 = sphi %s213, %s213
                %s225 = sphi %s210, %s210
              $region39: #{head_forward.1} parent=35 // loop_header_branch
                %222 = sbr.rel (%p220) target = $region43
              $region40: #{head_forward.1} parent=35 // loop_body
                %v226 = vld [vmem:[%s224] sm:$0xff]
                %227 = vst [vmem:[%s225] sm:$0xff] %v226
                %v228 = vld [vmem:[%s224 + $0x8] sm:$0xff]
                %229 = vst [vmem:[%s225 + $0x8] sm:$0xff] %v228
                %v230 = vld [vmem:[%s224 + $0x40] sm:$0xff]
                %231 = vst [vmem:[%s225 + $0x10] sm:$0xff] %v230
                %v232 = vld [vmem:[%s224 + $0x48] sm:$0xff]
                %233 = vst [vmem:[%s225 + $0x18] sm:$0xff] %v232
                %v234 = vld [vmem:[%s224 + $0x80] sm:$0xff]
                %235 = vst [vmem:[%s225 + $0x20] sm:$0xff] %v234
                %v236 = vld [vmem:[%s224 + $0x88] sm:$0xff]
                %237 = vst [vmem:[%s225 + $0x28] sm:$0xff] %v236
                %v238 = vld [vmem:[%s224 + $0xc0] sm:$0xff]
                %239 = vst [vmem:[%s225 + $0x30] sm:$0xff] %v238
                %v240 = vld [vmem:[%s224 + $0xc8] sm:$0xff]
                %241 = vst [vmem:[%s225 + $0x38] sm:$0xff] %v240
              $region41: #{head_forward.1} parent=35 // loop_footer
                %s223 = sadd.s32 1, %s219
              $region42: #{head_forward.1} parent=35 // loop_footer_branch
                %218 = sbr.rel target = $region38
              $region43: #{head_forward.1} parent=35 // loop_exit
                _
            $region36: #{head_forward.1} parent=31 // pred_fallthru
              _
            // Predicated region
            $region44: #{head_forward.1} parent=31 // pred_check
              _
            $region45: #{head_forward.1} parent=31 // pred_check_branch
              %243 = sbr.rel target = $region47
            $region46: #{head_forward.1} parent=31 // pred_region
              _
            $region47: #{head_forward.1} parent=31 // pred_fallthru
              _
          $region32: #{head_forward.1} parent=27 // pred_fallthru
            _
          %244 = vnop
        $region28: #{head_forward.1} parent=23 // pred_fallthru
          _
        // Predicated region
        $region48: #{head_forward.1} parent=23 // pred_check
          %p245 = pneg %p96
        $region49: #{head_forward.1} parent=23 // pred_check_branch
          %247 = sbr.rel (%p245) target = $region51
        $region50: #{head_forward.1} parent=23 // pred_region
          %s248 = smul.u32 2, %s20
          %p249 = scmp.lt.s32.totalorder %s248, 7
          %s250 = scalar_select %p249, %s248, 7
          %s251 = scalar_lea.vmem %s2, %s250
          %s252 = smul.u32 2, %s20
        $region51: #{head_forward.1} parent=23 // pred_fallthru
          _
        // Predicated region
        $region52: #{head_forward.1} parent=23 // pred_check
          %p253 = pneg %p122
        $region53: #{head_forward.1} parent=23 // pred_check_branch
          %255 = sbr.rel (%p253) target = $region55
        $region54: #{head_forward.1} parent=23 // pred_region
          %s256 = smul.u32 32, %s20
          %p257 = scmp.lt.s32.totalorder %s256, 127
          %s258 = scalar_select %p257, %s256, 127
          %s259 = smul.addr %s258, 8
          %s260 = scalar_lea.vmem %s3, %s259
          %s261 = smul.u32 32, %s20
        $region55: #{head_forward.1} parent=23 // pred_fallthru
          _
      $region24: #{head_forward.1} parent=5 // pred_fallthru
        _
      %p262 = scmp.le.s32.totalorder 1, %s12
      %p263 = scmp.lt.s32.totalorder %s12, 5
      %p264 = pnand %p262, %p263
      %p265 = pneg %p264
      // Predicated region
      $region56: #{head_forward.1} parent=5 // pred_check
        _
      $region57: #{head_forward.1} parent=5 // pred_check_branch
        %267 = sbr.rel (%p264) target = $region59
      $region58: #{head_forward.1} parent=5 // pred_region
        %s268 = ssub.s32 %s12, 1
        %s269 = sand.u32 %s63, 1
        %s270 = sand.u32 %s63, 1
        %s271 = smul.addr %s270, 64
        %s272 = scalar_lea.vmem [#allocation3], %s271
        // Predicated region
        $region60: #{head_forward.1} parent=58 // pred_check
          %p273 = pneg %p76
        $region61: #{head_forward.1} parent=58 // pred_check_branch
          %275 = sbr.rel (%p273) target = $region63
        $region62: #{head_forward.1} parent=58 // pred_region
          _
        $region63: #{head_forward.1} parent=58 // pred_fallthru
          _
        %p276 = scmp.lt.s32.totalorder %s21, 0
        %s277 = scalar_select %p276, %s21, 0
        %s278 = smul.addr %s277, 8
        %s279 = scalar_lea.vmem %s0, %s278
        %p280 = pneg %p50
        %p281 = pneg %p47
        %s282 = sand.u32 %s63, 1
        %s283 = sand.u32 %s63, 1
        %s284 = smul.addr %s283, 64
        %s285 = scalar_lea.vmem [#allocation3], %s284
        %p286 = pneg %p76
        %p287 = pneg %p73
        %s288 = smul.u32 2, %s22
        %p289 = scmp.lt.s32.totalorder %s288, 7
        %s290 = scalar_select %p289, %s288, 7
        %s291 = scalar_lea.vmem %s2, %s290
        %p292 = pneg %p102
        %p293 = pneg %p99
        %s294 = smul.u32 32, %s22
        %p295 = scmp.lt.s32.totalorder %s294, 127
        %s296 = scalar_select %p295, %s294, 127
        %s297 = smul.addr %s296, 8
        %s298 = scalar_lea.vmem %s3, %s297
        %p299 = pneg %p128
        %p300 = pneg %p125
        %p301 = pneg %p149
        %p302 = pneg %p146
        %p303 = pneg %p175
        %p304 = pneg %p172
        %p305 = scmp.lt.s32.totalorder %s21, 0
        %s306 = scalar_select %p305, %s21, 0
        %s307 = smul.addr %s306, 8
        %s308 = scalar_lea.vmem %s0, %s307
        %s309 = smul.u32 2, %s22
        %s310 = smul.u32 2, %s22
        %p311 = scmp.lt.s32.totalorder %s310, 7
        %s312 = scalar_select %p311, %s310, 7
        %s313 = scalar_lea.vmem %s2, %s312
        %s314 = smul.u32 2, %s22
        %s315 = smul.u32 32, %s22
        %p316 = scmp.lt.s32.totalorder %s315, 127
        %s317 = scalar_select %p316, %s315, 127
        %s318 = smul.addr %s317, 8
        %s319 = scalar_lea.vmem %s3, %s318
        %s320 = smul.u32 32, %s22
        %p321 = scmp.eq.s32.totalorder %s22, 0
        // Predicated region
        $region64: #{head_forward.1} parent=58 // pred_check
          %p322 = pneg %p321
        $region65: #{head_forward.1} parent=58 // pred_check_branch
          %324 = sbr.rel (%p322) target = $region67
        $region66: #{head_forward.1} parent=58 // pred_region
          %325 = vst [vmem:[#allocation2] sm:$0xff] 0.0
        $region67: #{head_forward.1} parent=58 // pred_fallthru
          _
        %v326 = vld [vmem:[%s308] sm:$0xff]
        %v327 = vld [vmem:[%s272] sm:$0xff]
        %v328 = vld [vmem:[%s272 + $0x8] sm:$0xff]
        %v329 = vld [vmem:[%s272 + $0x10] sm:$0xff]
        %v330 = vld [vmem:[%s272 + $0x18] sm:$0xff]
        %v331 = vld [vmem:[%s272 + $0x20] sm:$0xff]
        %v332 = vld [vmem:[%s272 + $0x28] sm:$0xff]
        %v333 = vld [vmem:[%s272 + $0x30] sm:$0xff]
        %v334 = vld [vmem:[%s272 + $0x38] sm:$0xff]
        %v335 = vld [vmem:[%s313] sm:$0x3]
        %v337 = vlaneseq
        %v338 = vshrl.u32 %v337, 7
        %v339 = vsub.s32 0, %v338
        %v340 = vrot.slane %v335, %v339
        %v341 = vlaneseq
        %v342 = vshrl.u32 %v341, 7
        %v343 = vsub.s32 1, %v342
        %v344 = vrot.slane %v335, %v343
        %vm347 = vcmask 261120
        %v349 = vsel %vm347, %v326, 0
        %351 = vmatprep.subr.mxu0 %v328
        %352 = vmatpush1.msra.mxu0 %v327
        %353 = vmatprep.subr.mxu0 %v330
        %354 = vmatpush1.msra.mxu0 %v329
        %355 = vmatprep.subr.mxu0 %v332
        %356 = vmatpush1.msra.mxu0 %v331
        %357 = vmatprep.subr.mxu0 %v334
        %358 = vmatpush1.msra.mxu0 %v333
        %359 = vmatprep.subr.mxu0 0.0
        %360 = vmatpush1.msra.mxu0 0.0
        %361 = vmatprep.subr.mxu0 0.0
        %362 = vmatpush1.msra.mxu0 0.0
        %363 = vmatprep.subr.mxu0 0.0
        %364 = vmatpush1.msra.mxu0 0.0
        %365 = vmatprep.subr.mxu0 0.0
        %366 = vmatpush1.msra.mxu0 0.0
        %367 = vmatprep.subr.mxu0 0.0
        %368 = vmatpush1.msra.mxu0 0.0
        %369 = vmatprep.subr.mxu0 0.0
        %370 = vmatpush1.msra.mxu0 0.0
        %371 = vmatprep.subr.mxu0 0.0
        %372 = vmatpush1.msra.mxu0 0.0
        %373 = vmatprep.subr.mxu0 0.0
        %374 = vmatpush1.msra.mxu0 0.0
        %375 = vmatprep.subr.mxu0 0.0
        %376 = vmatpush1.msra.mxu0 0.0
        %377 = vmatprep.subr.mxu0 0.0
        %378 = vmatpush1.msra.mxu0 0.0
        %379 = vmatprep.subr.mxu0 0.0
        %380 = vmatpush1.msra.mxu0 0.0
        %381 = vmatprep.subr.mxu0 0.0
        %382 = vmatpush1.msra.mxu0 0.0
        %383 = vmatprep.subr.mxu0 0.0
        %384 = vmatpush1.msra.mxu0 0.0
        %385 = vmatprep.subr.mxu0 0.0
        %386 = vmatpush1.msra.mxu0 0.0
        %387 = vmatprep.subr.mxu0 0.0
        %388 = vmatpush1.msra.mxu0 0.0
        %389 = vmatprep.subr.mxu0 0.0
        %390 = vmatpush1.msra.mxu0 0.0
        %391 = vmatprep.subr.mxu0 0.0
        %392 = vmatpush1.msra.mxu0 0.0
        %393 = vmatprep.subr.mxu0 0.0
        %394 = vmatpush1.msra.mxu0 0.0
        %395 = vmatprep.subr.mxu0 0.0
        %396 = vmatpush1.msra.mxu0 0.0
        %397 = vmatprep.subr.mxu0 0.0
        %398 = vmatpush1.msra.mxu0 0.0
        %399 = vmatprep.subr.mxu0 0.0
        %400 = vmatpush1.msra.mxu0 0.0
        %401 = vmatprep.subr.mxu0 0.0
        %402 = vmatpush1.msra.mxu0 0.0
        %403 = vmatprep.subr.mxu0 0.0
        %404 = vmatpush1.msra.mxu0 0.0
        %405 = vmatprep.subr.mxu0 0.0
        %406 = vmatpush1.msra.mxu0 0.0
        %407 = vmatprep.subr.mxu0 0.0
        %408 = vmatpush1.msra.mxu0 0.0
        %409 = vmatprep.subr.mxu0 0.0
        %410 = vmatpush1.msra.mxu0 0.0
        %411 = vmatprep.subr.mxu0 0.0
        %412 = vmatpush1.msra.mxu0 0.0
        %413 = vmatprep.subr.mxu0 0.0
        %414 = vmatpush1.msra.mxu0 0.0
        %415 = vmatprep.mubr.f32.mxu0 0.0
        %416 = vmatmul.mubr.f32.gmra.mrb[0].mxu0 %v349
        %v417 = vpop.f32.mrb[0].mxu0
        %v418 = vadd.f32 %v340, %v417
        %v419 = vpop.f32.mrb[0].mxu0
        %v420 = vadd.f32 %v344, %v419
        %421 = vdwg.mxu0
        %v422 = vmax.f32 %v418, 0.0
        %v423 = vmax.f32 %v420, 0.0
        %v424 = vld [vmem:[#allocation2] sm:$0xff]
        %v425 = vld [vmem:[%s319] sm:$0xff]
        %v426 = vld [vmem:[%s319 + $0x8] sm:$0xff]
        %v427 = vld [vmem:[%s319 + $0x10] sm:$0xff]
        %v428 = vld [vmem:[%s319 + $0x18] sm:$0xff]
        %v429 = vld [vmem:[%s319 + $0x20] sm:$0xff]
        %v430 = vld [vmem:[%s319 + $0x28] sm:$0xff]
        %v431 = vld [vmem:[%s319 + $0x30] sm:$0xff]
        %v432 = vld [vmem:[%s319 + $0x38] sm:$0xff]
        %v433 = vld [vmem:[%s319 + $0x40] sm:$0xff]
        %v434 = vld [vmem:[%s319 + $0x48] sm:$0xff]
        %v435 = vld [vmem:[%s319 + $0x50] sm:$0xff]
        %v436 = vld [vmem:[%s319 + $0x58] sm:$0xff]
        %v437 = vld [vmem:[%s319 + $0x60] sm:$0xff]
        %v438 = vld [vmem:[%s319 + $0x68] sm:$0xff]
        %v439 = vld [vmem:[%s319 + $0x70] sm:$0xff]
        %v440 = vld [vmem:[%s319 + $0x78] sm:$0xff]
        %v441 = vld [vmem:[%s319 + $0x80] sm:$0xff]
        %v442 = vld [vmem:[%s319 + $0x88] sm:$0xff]
        %v443 = vld [vmem:[%s319 + $0x90] sm:$0xff]
        %v444 = vld [vmem:[%s319 + $0x98] sm:$0xff]
        %v445 = vld [vmem:[%s319 + $0xa0] sm:$0xff]
        %v446 = vld [vmem:[%s319 + $0xa8] sm:$0xff]
        %v447 = vld [vmem:[%s319 + $0xb0] sm:$0xff]
        %v448 = vld [vmem:[%s319 + $0xb8] sm:$0xff]
        %v449 = vld [vmem:[%s319 + $0xc0] sm:$0xff]
        %v450 = vld [vmem:[%s319 + $0xc8] sm:$0xff]
        %v451 = vld [vmem:[%s319 + $0xd0] sm:$0xff]
        %v452 = vld [vmem:[%s319 + $0xd8] sm:$0xff]
        %v453 = vld [vmem:[%s319 + $0xe0] sm:$0xff]
        %v454 = vld [vmem:[%s319 + $0xe8] sm:$0xff]
        %v455 = vld [vmem:[%s319 + $0xf0] sm:$0xff]
        %v456 = vld [vmem:[%s319 + $0xf8] sm:$0xff]
        %457 = vmatprep.subr.mxu0 0.0
        %458 = vmatpush1.msra.mxu0 %v425
        %459 = vmatprep.subr.mxu0 0.0
        %460 = vmatpush1.msra.mxu0 %v426
        %461 = vmatprep.subr.mxu0 0.0
        %462 = vmatpush1.msra.mxu0 %v427
        %463 = vmatprep.subr.mxu0 0.0
        %464 = vmatpush1.msra.mxu0 %v428
        %465 = vmatprep.subr.mxu0 0.0
        %466 = vmatpush1.msra.mxu0 %v429
        %467 = vmatprep.subr.mxu0 0.0
        %468 = vmatpush1.msra.mxu0 %v430
        %469 = vmatprep.subr.mxu0 0.0
        %470 = vmatpush1.msra.mxu0 %v431
        %471 = vmatprep.subr.mxu0 0.0
        %472 = vmatpush1.msra.mxu0 %v432
        %473 = vmatprep.subr.mxu0 0.0
        %474 = vmatpush1.msra.mxu0 %v433
        %475 = vmatprep.subr.mxu0 0.0
        %476 = vmatpush1.msra.mxu0 %v434
        %477 = vmatprep.subr.mxu0 0.0
        %478 = vmatpush1.msra.mxu0 %v435
        %479 = vmatprep.subr.mxu0 0.0
        %480 = vmatpush1.msra.mxu0 %v436
        %481 = vmatprep.subr.mxu0 0.0
        %482 = vmatpush1.msra.mxu0 %v437
        %483 = vmatprep.subr.mxu0 0.0
        %484 = vmatpush1.msra.mxu0 %v438
        %485 = vmatprep.subr.mxu0 0.0
        %486 = vmatpush1.msra.mxu0 %v439
        %487 = vmatprep.subr.mxu0 0.0
        %488 = vmatpush1.msra.mxu0 %v440
        %489 = vmatprep.subr.mxu0 0.0
        %490 = vmatpush1.msra.mxu0 %v441
        %491 = vmatprep.subr.mxu0 0.0
        %492 = vmatpush1.msra.mxu0 %v442
        %493 = vmatprep.subr.mxu0 0.0
        %494 = vmatpush1.msra.mxu0 %v443
        %495 = vmatprep.subr.mxu0 0.0
        %496 = vmatpush1.msra.mxu0 %v444
        %497 = vmatprep.subr.mxu0 0.0
        %498 = vmatpush1.msra.mxu0 %v445
        %499 = vmatprep.subr.mxu0 0.0
        %500 = vmatpush1.msra.mxu0 %v446
        %501 = vmatprep.subr.mxu0 0.0
        %502 = vmatpush1.msra.mxu0 %v447
        %503 = vmatprep.subr.mxu0 0.0
        %504 = vmatpush1.msra.mxu0 %v448
        %505 = vmatprep.subr.mxu0 0.0
        %506 = vmatpush1.msra.mxu0 %v449
        %507 = vmatprep.subr.mxu0 0.0
        %508 = vmatpush1.msra.mxu0 %v450
        %509 = vmatprep.subr.mxu0 0.0
        %510 = vmatpush1.msra.mxu0 %v451
        %511 = vmatprep.subr.mxu0 0.0
        %512 = vmatpush1.msra.mxu0 %v452
        %513 = vmatprep.subr.mxu0 0.0
        %514 = vmatpush1.msra.mxu0 %v453
        %515 = vmatprep.subr.mxu0 0.0
        %516 = vmatpush1.msra.mxu0 %v454
        %517 = vmatprep.subr.mxu0 0.0
        %518 = vmatpush1.msra.mxu0 %v455
        %519 = vmatprep.subr.mxu0 0.0
        %520 = vmatpush1.msra.mxu0 %v456
        %521 = vmatprep.mubr.f32.mxu0 %v423
        %522 = vmatmul.mubr.f32.gmra.mrb[0].mxu0 %v422
        %v523 = vpop.f32.mrb[0].mxu0
        %v524 = vadd.f32 0.0, %v523
        %v525 = vpop.f32.mrb[0].mxu0
        %526 = vdwg.mxu0
        %v527 = vadd.f32 %v424, %v524
        %528 = vst [vmem:[#allocation2] sm:$0xff] %v527
        %p529 = scmp.eq.s32.totalorder %s22, 3
        // Predicated region
        $region68: #{head_forward.1} parent=58 // pred_check
          %p530 = pneg %p529
        $region69: #{head_forward.1} parent=58 // pred_check_branch
          %532 = sbr.rel (%p530) target = $region71
        $region70: #{head_forward.1} parent=58 // pred_region
          %v533 = vld [vmem:[#allocation2] sm:$0xff]
          %v534 = vld [vmem:[%s4] sm:$0x1]
          %v536 = vlaneseq
          %v537 = vshrl.u32 %v536, 7
          %v538 = vsub.s32 0, %v537
          %v539 = vrot.slane %v534, %v538
          %v541 = vadd.f32 %v533, %v539
          %542 = vst [vmem:[#allocation4] sm:$0xff] %v541
        $region71: #{head_forward.1} parent=58 // pred_fallthru
          _
        // Predicated region
        $region72: #{head_forward.1} parent=58 // pred_check
          %p543 = pneg %p172
        $region73: #{head_forward.1} parent=58 // pred_check_branch
          %545 = sbr.rel (%p543) target = $region75
        $region74: #{head_forward.1} parent=58 // pred_region
          %s547 = ssub.s32 128, 128
          %548 = vsyncadd [#allocation5], %s547
          %s549 = smul.addr %s21, 128
          %s550 = scalar_lea.hbm %s5, %s549
          %s552 = sshll.u32 [#allocation4], 4
          %s553 = int_to_ptr.vmem [resolvable:$true] %s552
          %555 = dma.vmem_to_hbm [thread:$0]  %s553, 128, %s550, [#allocation5]
        $region75: #{head_forward.1} parent=58 // pred_fallthru
          _
        // Predicated region
        $region76: #{head_forward.1} parent=58 // pred_check
          %p556 = pneg %p172
        $region77: #{head_forward.1} parent=58 // pred_check_branch
          %558 = sbr.rel (%p556) target = $region79
        $region78: #{head_forward.1} parent=58 // pred_region
          %559 = dma.done [#allocation5], 128
        $region79: #{head_forward.1} parent=58 // pred_fallthru
          _
      $region59: #{head_forward.1} parent=5 // pred_fallthru
        _
      %p560 = scmp.le.s32.totalorder 2, %s12
      // Predicated region
      $region80: #{head_forward.1} parent=5 // pred_check
        %p561 = pneg %p560
      $region81: #{head_forward.1} parent=5 // pred_check_branch
        %563 = sbr.rel (%p561) target = $region83
      $region82: #{head_forward.1} parent=5 // pred_region
        %s564 = ssub.s32 %s12, 2
      $region83: #{head_forward.1} parent=5 // pred_fallthru
        _
    $region6: #{head_forward.1} parent=1 // loop_footer
      %s16 = sadd.s32 1, %s12
    $region7: #{head_forward.1} parent=1 // loop_footer_branch
      %11 = sbr.rel target = $region3
    $region8: #{head_forward.1} parent=1 // loop_exit
      _
    %565 = vsyncpa [#allocation5], 1
    %s566 = scalar_lea.sflag [#allocation5], 1
    %567 = vsyncpa %s566, 1

</llo_original>
